<compile_context>
chip_gen: v5e
topology: v5e:2x2
jax: 0.10.0
libtpu: 0.0.40
codegen_flags: <defaults>
</compile_context>

<pallas_src>
from functools import partial

import jax
import jax.numpy as jnp
from jax.experimental import pallas as pl
from jax.experimental.pallas import tpu as pltpu


def _round_up(x, m):
    return ((x + m - 1) // m) * m


def actor_kernel(x_ref, w1_ref, b1_ref, w2_ref, b2_ref, w3_ref, b3_ref, o_ref):
    x = x_ref[...]

    # fc1 + ReLU
    h1 = jnp.dot(x, w1_ref[...], preferred_element_type=jnp.float32) + b1_ref[...]
    h1 = jnp.maximum(h1, 0.0)

    # fc2 + ReLU
    h2 = jnp.dot(h1, w2_ref[...], preferred_element_type=jnp.float32) + b2_ref[...]
    h2 = jnp.maximum(h2, 0.0)

    # fc3 (logits, lane-dense padded width; padded cols carry -1e30 bias)
    logits = jnp.dot(h2, w3_ref[...], preferred_element_type=jnp.float32) + b3_ref[...]

    # numerically stable softmax over the last axis (EUP exp + approx recip)
    m = jnp.max(logits, axis=-1, keepdims=True)
    e = jnp.exp(logits - m)
    denom = jnp.sum(e, axis=-1, keepdims=True)
    o_ref[...] = e * pl.reciprocal(denom, approx=True)


def init_params(key, in_dim, fc1_dims, fc2_dims, num_actions):
    """Deterministic init mimicking torch.nn.Linear default (U[-1/sqrt(fan_in), +])."""
    ks = jax.random.split(key, 6)

    def linear(kw, kb, fan_in, fan_out):
        bound = 1.0 / jnp.sqrt(jnp.float32(fan_in))
        # stored as (in, out) so kernel does x @ W
        w = jax.random.uniform(kw, (fan_in, fan_out), jnp.float32, -bound, bound)
        b = jax.random.uniform(kb, (1, fan_out), jnp.float32, -bound, bound)
        return w, b

    w1, b1 = linear(ks[0], ks[1], in_dim, fc1_dims)
    w2, b2 = linear(ks[2], ks[3], fc1_dims, fc2_dims)
    w3, b3 = linear(ks[4], ks[5], fc2_dims, num_actions)
    return (w1, b1, w2, b2, w3, b3)


def pad_params(params):
    """Pad every lane dimension up to a multiple of 128 (done once, host-side).

    Zero padding everywhere except b3's padded action columns, which get -1e30
    so the softmax assigns them ~0 probability.
    NOTE: for v6e/v7x, casting the padded weights to bfloat16 here (keeping
    f32 accumulation) halves weight DMA/VMEM; kept f32 for exact parity.
    """
    w1, b1, w2, b2, w3, b3 = params
    K, F1 = w1.shape
    F2 = w2.shape[1]
    A = w3.shape[1]
    Kp, F1p, F2p, Ap = (_round_up(d, 128) for d in (K, F1, F2, A))

    w1p = jnp.zeros((Kp, F1p), jnp.float32).at[:K, :F1].set(w1)
    b1p = jnp.zeros((1, F1p), jnp.float32).at[:, :F1].set(b1)
    w2p = jnp.zeros((F1p, F2p), jnp.float32).at[:F1, :F2].set(w2)
    b2p = jnp.zeros((1, F2p), jnp.float32).at[:, :F2].set(b2)
    w3p = jnp.zeros((F2p, Ap), jnp.float32).at[:F2, :A].set(w3)
    b3p = jnp.full((1, Ap), -1e30, jnp.float32).at[:, :A].set(b3)
    return (w1p, b1p, w2p, b2p, w3p, b3p)


@partial(jax.jit, static_argnums=(2, 3))
def actor_forward(state, padded_params, num_actions, tile_b=512):
    """Fused actor MLP. state: (B, in_dim) f32 -> probs (B, num_actions) f32."""
    w1p, b1p, w2p, b2p, w3p, b3p = padded_params
    B, K = state.shape
    Kp, F1p = w1p.shape
    F2p = w2p.shape[1]
    Ap = w3p.shape[1]

    # Batch tile: big enough to pipeline, never larger than the (8-aligned) batch.
    TILE_B = min(tile_b, _round_up(B, 8))
    Bp = _round_up(B, TILE_B)

    # Zero-pad batch rows and the tiny input-feature dim to lane-aligned shapes.
    xp = jnp.zeros((Bp, Kp), jnp.float32).at[:B, :K].set(state)

    resident = lambda shape: pl.BlockSpec(shape, lambda i: (0, 0))

    out = pl.pallas_call(
        actor_kernel,
        out_shape=jax.ShapeDtypeStruct((Bp, Ap), jnp.float32),
        grid=(Bp // TILE_B,),
        in_specs=[
            pl.BlockSpec((TILE_B, Kp), lambda i: (i, 0)),   # x: tiled over batch
            resident((Kp, F1p)),                            # w1 (VMEM-resident)
            resident((1, F1p)),                             # b1
            resident((F1p, F2p)),                           # w2
            resident((1, F2p)),                             # b2
            resident((F2p, Ap)),                            # w3
            resident((1, Ap)),                              # b3
        ],
        out_specs=pl.BlockSpec((TILE_B, Ap), lambda i: (i, 0)),
        compiler_params=pltpu.CompilerParams(
            dimension_semantics=("parallel",),
        ),
    )(xp, w1p, b1p, w2p, b2p, w3p, b3p)

    return out[:B, :num_actions]


if __name__ == "__main__":
    # Small shapes consistent with the module: input_dims=(8,), fc1=fc2=256,
    # num_actions=4, batch=8.
    batch, in_dim, fc1_dims, fc2_dims, num_actions = 8, 8, 256, 256, 4

    key = jax.random.PRNGKey(0)
    k_state, k_params = jax.random.split(key)

    state = jax.random.normal(k_state, (batch, in_dim), jnp.float32)
    params = init_params(k_params, in_dim, fc1_dims, fc2_dims, num_actions)
    padded_params = pad_params(params)

    probs = actor_forward(state, padded_params, num_actions)
    probs = jax.block_until_ready(probs)

    # Pure-JAX reference check of the same forward pass.
    w1, b1, w2, b2, w3, b3 = params
    h1 = jnp.maximum(state @ w1 + b1, 0.0)
    h2 = jnp.maximum(h1 @ w2 + b2, 0.0)
    ref = jax.nn.softmax(h2 @ w3 + b3, axis=-1)

    assert probs.shape == (batch, num_actions)
    # approx reciprocal -> slightly looser tolerances than exact division
    assert jnp.allclose(jnp.sum(probs, axis=-1), 1.0, atol=1e-2)
    assert jnp.allclose(probs, ref, atol=5e-3, rtol=5e-3)

    print("KERNEL_OK")
</pallas_src>

<mosaic_0001>
module attributes {stable_mosaic.version = 11 : i64} {
  func.func @actor_kernel(%arg0: i32, %arg1: memref<8x128xf32, #tpu.memory_space<vmem>>, %arg2: memref<128x256xf32, #tpu.memory_space<vmem>>, %arg3: memref<1x256xf32, #tpu.memory_space<vmem>>, %arg4: memref<256x256xf32, #tpu.memory_space<vmem>>, %arg5: memref<1x256xf32, #tpu.memory_space<vmem>>, %arg6: memref<256x128xf32, #tpu.memory_space<vmem>>, %arg7: memref<1x128xf32, #tpu.memory_space<vmem>>, %arg8: memref<8x128xf32, #tpu.memory_space<vmem>>) attributes {dimension_semantics = [#tpu.dimension_semantics<parallel>], iteration_bounds = array<i64: 1>, scalar_prefetch = 0 : i64, scratch_operands = 0 : i64, tpu.core_type = #tpu.core_type<tc>, window_params = [{transform_indices = @transform_0, window_bounds = array<i64: 8, 128>}, {pipeline_mode = #tpu.pipeline_mode<synchronous>, transform_indices = @transform_1, window_bounds = array<i64: 128, 256>}, {pipeline_mode = #tpu.pipeline_mode<synchronous>, transform_indices = @transform_2, window_bounds = array<i64: 1, 256>}, {pipeline_mode = #tpu.pipeline_mode<synchronous>, transform_indices = @transform_3, window_bounds = array<i64: 256, 256>}, {pipeline_mode = #tpu.pipeline_mode<synchronous>, transform_indices = @transform_4, window_bounds = array<i64: 1, 256>}, {pipeline_mode = #tpu.pipeline_mode<synchronous>, transform_indices = @transform_5, window_bounds = array<i64: 256, 128>}, {pipeline_mode = #tpu.pipeline_mode<synchronous>, transform_indices = @transform_6, window_bounds = array<i64: 1, 128>}, {transform_indices = @transform_7, window_bounds = array<i64: 8, 128>}]} {
    %c0 = arith.constant 0 : index
    %c0_0 = arith.constant 0 : index
    %0 = vector.load %arg1[%c0, %c0_0] : memref<8x128xf32, #tpu.memory_space<vmem>>, vector<8x128xf32>
    %c0_1 = arith.constant 0 : index
    %c0_2 = arith.constant 0 : index
    %1 = vector.load %arg2[%c0_1, %c0_2] : memref<128x256xf32, #tpu.memory_space<vmem>>, vector<128x256xf32>
    %cst = arith.constant dense<0.000000e+00> : vector<8x256xf32>
    %2 = tpu.matmul %0, %1, %cst {dimension_numbers = #tpu.dot_dimension_numbers<[1], [0], [0], [1], [0, 0, 1, 1], [], []>} : vector<8x128xf32>, vector<128x256xf32>, vector<8x256xf32> -> vector<8x256xf32>
    %c0_3 = arith.constant 0 : index
    %c0_4 = arith.constant 0 : index
    %3 = vector.load %arg3[%c0_3, %c0_4] : memref<1x256xf32, #tpu.memory_space<vmem>>, vector<1x256xf32>
    %4 = vector.broadcast %3 : vector<1x256xf32> to vector<8x256xf32>
    %5 = arith.addf %2, %4 : vector<8x256xf32>
    %cst_5 = arith.constant 0.000000e+00 : f32
    %6 = vector.broadcast %cst_5 : f32 to vector<8x256xf32>
    %7 = arith.maximumf %5, %6 : vector<8x256xf32>
    %c0_6 = arith.constant 0 : index
    %c0_7 = arith.constant 0 : index
    %8 = vector.load %arg4[%c0_6, %c0_7] : memref<256x256xf32, #tpu.memory_space<vmem>>, vector<256x256xf32>
    %cst_8 = arith.constant dense<0.000000e+00> : vector<8x256xf32>
    %9 = tpu.matmul %7, %8, %cst_8 {dimension_numbers = #tpu.dot_dimension_numbers<[1], [0], [0], [1], [0, 0, 1, 1], [], []>} : vector<8x256xf32>, vector<256x256xf32>, vector<8x256xf32> -> vector<8x256xf32>
    %c0_9 = arith.constant 0 : index
    %c0_10 = arith.constant 0 : index
    %10 = vector.load %arg5[%c0_9, %c0_10] : memref<1x256xf32, #tpu.memory_space<vmem>>, vector<1x256xf32>
    %11 = vector.broadcast %10 : vector<1x256xf32> to vector<8x256xf32>
    %12 = arith.addf %9, %11 : vector<8x256xf32>
    %cst_11 = arith.constant 0.000000e+00 : f32
    %13 = vector.broadcast %cst_11 : f32 to vector<8x256xf32>
    %14 = arith.maximumf %12, %13 : vector<8x256xf32>
    %c0_12 = arith.constant 0 : index
    %c0_13 = arith.constant 0 : index
    %15 = vector.load %arg6[%c0_12, %c0_13] : memref<256x128xf32, #tpu.memory_space<vmem>>, vector<256x128xf32>
    %cst_14 = arith.constant dense<0.000000e+00> : vector<8x128xf32>
    %16 = tpu.matmul %14, %15, %cst_14 {dimension_numbers = #tpu.dot_dimension_numbers<[1], [0], [0], [1], [0, 0, 1, 1], [], []>} : vector<8x256xf32>, vector<256x128xf32>, vector<8x128xf32> -> vector<8x128xf32>
    %c0_15 = arith.constant 0 : index
    %c0_16 = arith.constant 0 : index
    %17 = vector.load %arg7[%c0_15, %c0_16] : memref<1x128xf32, #tpu.memory_space<vmem>>, vector<1x128xf32>
    %18 = vector.broadcast %17 : vector<1x128xf32> to vector<8x128xf32>
    %19 = arith.addf %16, %18 : vector<8x128xf32>
    %cst_17 = arith.constant dense<0xFF800000> : vector<8xf32>
    %20 = vector.multi_reduction <maximumf>, %19, %cst_17 [1] : vector<8x128xf32> to vector<8xf32>
    %21 = vector.shape_cast %20 : vector<8xf32> to vector<8x1xf32>
    %22 = vector.broadcast %21 : vector<8x1xf32> to vector<8x128xf32>
    %23 = arith.subf %19, %22 : vector<8x128xf32>
    %24 = math.exp %23 : vector<8x128xf32>
    %cst_18 = arith.constant dense<0.000000e+00> : vector<8xf32>
    %25 = vector.multi_reduction <add>, %24, %cst_18 [1] : vector<8x128xf32> to vector<8xf32>
    %26 = vector.shape_cast %25 : vector<8xf32> to vector<8x1xf32>
    %27 = tpu.reciprocal %26 {approx = true} : vector<8x1xf32> -> vector<8x1xf32>
    %28 = vector.broadcast %27 : vector<8x1xf32> to vector<8x128xf32>
    %29 = arith.mulf %24, %28 : vector<8x128xf32>
    %c0_19 = arith.constant 0 : index
    %c0_20 = arith.constant 0 : index
    %30 = vector.load %arg8[%c0_19, %c0_20] : memref<8x128xf32, #tpu.memory_space<vmem>>, vector<8x128xf32>
    tpu.vector_store %arg8[%c0_19, %c0_20], %29 {strides = array<i32>} : memref<8x128xf32, #tpu.memory_space<vmem>>, vector<8x128xf32>,
    return
  }
  func.func @transform_0(%arg0: i32) -> (i32, i32) {
    %c0_i32 = arith.constant 0 : i32
    %c0_i32_0 = arith.constant 0 : i32
    return %arg0, %c0_i32 : i32, i32
  }
  func.func @transform_1(%arg0: i32) -> (i32, i32) {
    %c0_i32 = arith.constant 0 : i32
    %c0_i32_0 = arith.constant 0 : i32
    %c0_i32_1 = arith.constant 0 : i32
    return %c0_i32, %c0_i32_0 : i32, i32
  }
  func.func @transform_2(%arg0: i32) -> (i32, i32) {
    %c0_i32 = arith.constant 0 : i32
    %c0_i32_0 = arith.constant 0 : i32
    %c0_i32_1 = arith.constant 0 : i32
    return %c0_i32, %c0_i32_0 : i32, i32
  }
  func.func @transform_3(%arg0: i32) -> (i32, i32) {
    %c0_i32 = arith.constant 0 : i32
    %c0_i32_0 = arith.constant 0 : i32
    %c0_i32_1 = arith.constant 0 : i32
    return %c0_i32, %c0_i32_0 : i32, i32
  }
  func.func @transform_4(%arg0: i32) -> (i32, i32) {
    %c0_i32 = arith.constant 0 : i32
    %c0_i32_0 = arith.constant 0 : i32
    %c0_i32_1 = arith.constant 0 : i32
    return %c0_i32, %c0_i32_0 : i32, i32
  }
  func.func @transform_5(%arg0: i32) -> (i32, i32) {
    %c0_i32 = arith.constant 0 : i32
    %c0_i32_0 = arith.constant 0 : i32
    %c0_i32_1 = arith.constant 0 : i32
    return %c0_i32, %c0_i32_0 : i32, i32
  }
  func.func @transform_6(%arg0: i32) -> (i32, i32) {
    %c0_i32 = arith.constant 0 : i32
    %c0_i32_0 = arith.constant 0 : i32
    %c0_i32_1 = arith.constant 0 : i32
    return %c0_i32, %c0_i32_0 : i32, i32
  }
  func.func @transform_7(%arg0: i32) -> (i32, i32) {
    %c0_i32 = arith.constant 0 : i32
    %c0_i32_0 = arith.constant 0 : i32
    return %arg0, %c0_i32 : i32, i32
  }
}

</mosaic_0001>

<llo_original>
// kernel: actor_forward.1
$region0: #{actor_forward.1}
  #allocation0 [shape = 'u32[]', space=smem, size = 0x4, offset = 0x4, fixed_abs, tag = 'smem constant byte address 0x4 - core index']
  #allocation1 [shape = 'u32[72,128]{1,0:T(1,128)}', space=vmem, size = 0x9000, scoped, tag = 'internal scratch']
  %s0 = inlined_call_operand.vmem [shape: f32[8,128], index: 0, kind: input, shape index: {}]
  %s1 = inlined_call_operand.hbm [shape: f32[128,256], index: 1, kind: input, shape index: {}]
  %s2 = inlined_call_operand.vmem [shape: f32[1,256], index: 2, kind: input, shape index: {}]
  %s3 = inlined_call_operand.hbm [shape: f32[256,256], index: 3, kind: input, shape index: {}]
  %s4 = inlined_call_operand.vmem [shape: f32[1,256], index: 4, kind: input, shape index: {}]
  %s5 = inlined_call_operand.hbm [shape: f32[256,128], index: 5, kind: input, shape index: {}]
  %s6 = inlined_call_operand.vmem [shape: f32[1,128], index: 6, kind: input, shape index: {}]
  %s7 = inlined_call_operand.vmem [shape: f32[8,128], index: 7, kind: output, shape index: {}]
  %s8 = sld [smem:[#allocation0]]
  $region50: #{actor_forward.1} parent=0
    _
  %s10 = ssub.s32 1, %s8
  %s11 = scalar_select 0, %s10, %s8
  $region1: #{actor_forward.1} parent=0
    #allocation2 [shape = 'u8[131072]{0}', space=vmem, size = 0x20000, scoped, tag = 'input window, operand 1, single buffered']
    #allocation3 [shape = 's32[1]{0}', space=sflag, size = 0x4, scoped, tag = 'scoped memory for actor_forward.1']
    #allocation4 [shape = 'u8[262144]{0}', space=vmem, size = 0x40000, scoped, tag = 'input window, operand 3, single buffered']
    #allocation5 [shape = 's32[1]{0}', space=sflag, size = 0x4, scoped, tag = 'scoped memory for actor_forward.1']
    #allocation6 [shape = 'u8[131072]{0}', space=vmem, size = 0x20000, scoped, tag = 'input window, operand 5, single buffered']
    %12 = vsyncpa [#allocation3], 0
    %13 = vsyncpa [#allocation5], 0
    // Predicated region
    $region2: #{actor_forward.1} parent=1 // pred_check
      _
    $region3: #{actor_forward.1} parent=1 // pred_check_branch
      %15 = sbr.rel (0) target = $region5
    $region4: #{actor_forward.1} parent=1 // pred_region
      _
    $region5: #{actor_forward.1} parent=1 // pred_fallthru
      _
    // Predicated region
    $region6: #{actor_forward.1} parent=1 // pred_check
      _
    $region7: #{actor_forward.1} parent=1 // pred_check_branch
      %17 = sbr.rel (0) target = $region9
    $region8: #{actor_forward.1} parent=1 // pred_region
      %19 = vsyncadd [#allocation3], 0
      %s20 = sshll.u32 %s1, 4
      %s21 = int_to_ptr.hbm [resolvable:$true] %s20
      %s22 = sshll.u32 [#allocation2], 4
      %s23 = int_to_ptr.vmem [resolvable:$true] %s22
      %28 = dma.hbm_to_vmem [thread:$0]  %s21, 4096, %s23, [#allocation3], 256, 256, 16
    $region9: #{actor_forward.1} parent=1 // pred_fallthru
      _
    // Predicated region
    $region10: #{actor_forward.1} parent=1 // pred_check
      _
    $region11: #{actor_forward.1} parent=1 // pred_check_branch
      %30 = sbr.rel (0) target = $region13
    $region12: #{actor_forward.1} parent=1 // pred_region
      _
    $region13: #{actor_forward.1} parent=1 // pred_fallthru
      _
    // Predicated region
    $region14: #{actor_forward.1} parent=1 // pred_check
      _
    $region15: #{actor_forward.1} parent=1 // pred_check_branch
      %32 = sbr.rel (0) target = $region17
    $region16: #{actor_forward.1} parent=1 // pred_region
      %34 = vsyncadd [#allocation5], 0
      %s35 = sshll.u32 %s3, 4
      %s36 = int_to_ptr.hbm [resolvable:$true] %s35
      %s37 = sshll.u32 [#allocation4], 4
      %s38 = int_to_ptr.vmem [resolvable:$true] %s37
      %43 = dma.hbm_to_vmem [thread:$0]  %s36, 8192, %s38, [#allocation5], 256, 256, 16
    $region17: #{actor_forward.1} parent=1 // pred_fallthru
      _
    // Predicated region
    $region18: #{actor_forward.1} parent=1 // pred_check
      _
    $region19: #{actor_forward.1} parent=1 // pred_check_branch
      %45 = sbr.rel (0) target = $region21
    $region20: #{actor_forward.1} parent=1 // pred_region
      _
    $region21: #{actor_forward.1} parent=1 // pred_fallthru
      _
    // Predicated region
    $region22: #{actor_forward.1} parent=1 // pred_check
      _
    $region23: #{actor_forward.1} parent=1 // pred_check_branch
      %47 = sbr.rel (0) target = $region25
    $region24: #{actor_forward.1} parent=1 // pred_region
      %49 = vsyncadd [#allocation5], 0
      %s50 = sshll.u32 %s5, 4
      %s51 = int_to_ptr.hbm [resolvable:$true] %s50
      %s52 = sshll.u32 [#allocation6], 4
      %s53 = int_to_ptr.vmem [resolvable:$true] %s52
      %58 = dma.hbm_to_vmem [thread:$0]  %s51, 4096, %s53, [#allocation5], 128, 128, 8
    $region25: #{actor_forward.1} parent=1 // pred_fallthru
      _
    // Predicated region
    $region26: #{actor_forward.1} parent=1 // pred_check
      _
    $region27: #{actor_forward.1} parent=1 // pred_check_branch
      %60 = sbr.rel (0) target = $region29
    $region28: #{actor_forward.1} parent=1 // pred_region
      _
    $region29: #{actor_forward.1} parent=1 // pred_fallthru
      _
    // Predicated region
    $region30: #{actor_forward.1} parent=1 // pred_check
      _
    $region31: #{actor_forward.1} parent=1 // pred_check_branch
      %62 = sbr.rel (0) target = $region33
    $region32: #{actor_forward.1} parent=1 // pred_region
      %64 = dma.done [#allocation3], 4096
    $region33: #{actor_forward.1} parent=1 // pred_fallthru
      _
    // Predicated region
    $region34: #{actor_forward.1} parent=1 // pred_check
      _
    $region35: #{actor_forward.1} parent=1 // pred_check_branch
      %66 = sbr.rel (0) target = $region37
    $region36: #{actor_forward.1} parent=1 // pred_region
      %68 = dma.done [#allocation5], 8192
    $region37: #{actor_forward.1} parent=1 // pred_fallthru
      _
    // Predicated region
    $region38: #{actor_forward.1} parent=1 // pred_check
      _
    $region39: #{actor_forward.1} parent=1 // pred_check_branch
      %70 = sbr.rel (0) target = $region41
    $region40: #{actor_forward.1} parent=1 // pred_region
      %72 = dma.done [#allocation5], 4096
    $region41: #{actor_forward.1} parent=1 // pred_fallthru
      _
    %v73 = vld [vmem:[%s0] sm:$0xff]
    %v74 = vld [vmem:[#allocation2] sm:$0xff]
    %v75 = vld [vmem:[#allocation2 + $0x8] sm:$0xff]
    %v76 = vld [vmem:[#allocation2 + $0x10] sm:$0xff]
    %v77 = vld [vmem:[#allocation2 + $0x18] sm:$0xff]
    %v78 = vld [vmem:[#allocation2 + $0x20] sm:$0xff]
    %v79 = vld [vmem:[#allocation2 + $0x28] sm:$0xff]
    %v80 = vld [vmem:[#allocation2 + $0x30] sm:$0xff]
    %v81 = vld [vmem:[#allocation2 + $0x38] sm:$0xff]
    %v82 = vld [vmem:[#allocation2 + $0x40] sm:$0xff]
    %v83 = vld [vmem:[#allocation2 + $0x48] sm:$0xff]
    %v84 = vld [vmem:[#allocation2 + $0x50] sm:$0xff]
    %v85 = vld [vmem:[#allocation2 + $0x58] sm:$0xff]
    %v86 = vld [vmem:[#allocation2 + $0x60] sm:$0xff]
    %v87 = vld [vmem:[#allocation2 + $0x68] sm:$0xff]
    %v88 = vld [vmem:[#allocation2 + $0x70] sm:$0xff]
    %v89 = vld [vmem:[#allocation2 + $0x78] sm:$0xff]
    %v90 = vld [vmem:[#allocation2 + $0x80] sm:$0xff]
    %v91 = vld [vmem:[#allocation2 + $0x88] sm:$0xff]
    %v92 = vld [vmem:[#allocation2 + $0x90] sm:$0xff]
    %v93 = vld [vmem:[#allocation2 + $0x98] sm:$0xff]
    %v94 = vld [vmem:[#allocation2 + $0xa0] sm:$0xff]
    %v95 = vld [vmem:[#allocation2 + $0xa8] sm:$0xff]
    %v96 = vld [vmem:[#allocation2 + $0xb0] sm:$0xff]
    %v97 = vld [vmem:[#allocation2 + $0xb8] sm:$0xff]
    %v98 = vld [vmem:[#allocation2 + $0xc0] sm:$0xff]
    %v99 = vld [vmem:[#allocation2 + $0xc8] sm:$0xff]
    %v100 = vld [vmem:[#allocation2 + $0xd0] sm:$0xff]
    %v101 = vld [vmem:[#allocation2 + $0xd8] sm:$0xff]
    %v102 = vld [vmem:[#allocation2 + $0xe0] sm:$0xff]
    %v103 = vld [vmem:[#allocation2 + $0xe8] sm:$0xff]
    %v104 = vld [vmem:[#allocation2 + $0xf0] sm:$0xff]
    %v105 = vld [vmem:[#allocation2 + $0xf8] sm:$0xff]
    %v106 = vld [vmem:[%s2] sm:$0x3]
    %v108 = vperm.slane %v106, 0
    %v109 = vperm.slane %v106, 1
    %112 = vmatpush.msra.mxu0 %v104
    %113 = vmatpush.msra.mxu0 %v102
    %114 = vmatpush.msra.mxu0 %v100
    %115 = vmatpush.msra.mxu0 %v98
    %116 = vmatpush.msra.mxu0 %v96
    %117 = vmatpush.msra.mxu0 %v94
    %118 = vmatpush.msra.mxu0 %v92
    %119 = vmatpush.msra.mxu0 %v90
    %120 = vmatpush.msra.mxu0 %v88
    %121 = vmatpush.msra.mxu0 %v86
    %122 = vmatpush.msra.mxu0 %v84
    %123 = vmatpush.msra.mxu0 %v82
    %124 = vmatpush.msra.mxu0 %v80
    %125 = vmatpush.msra.mxu0 %v78
    %126 = vmatpush.msra.mxu0 %v76
    %127 = vmatpush.msra.mxu0 %v74
    %128 = vmatmul.f32.gmra.mxu0 %v73
    %v129 = vpop.f32.mrf.mxu0
    %v130 = vadd.f32 %v108, %v129
    %131 = vdwg.mxu0
    %132 = vmatpush.msra.mxu0 %v105
    %133 = vmatpush.msra.mxu0 %v103
    %134 = vmatpush.msra.mxu0 %v101
    %135 = vmatpush.msra.mxu0 %v99
    %136 = vmatpush.msra.mxu0 %v97
    %137 = vmatpush.msra.mxu0 %v95
    %138 = vmatpush.msra.mxu0 %v93
    %139 = vmatpush.msra.mxu0 %v91
    %140 = vmatpush.msra.mxu0 %v89
    %141 = vmatpush.msra.mxu0 %v87
    %142 = vmatpush.msra.mxu0 %v85
    %143 = vmatpush.msra.mxu0 %v83
    %144 = vmatpush.msra.mxu0 %v81
    %145 = vmatpush.msra.mxu0 %v79
    %146 = vmatpush.msra.mxu0 %v77
    %147 = vmatpush.msra.mxu0 %v75
    %148 = vmatmul.f32.gmra.mxu0 %v73
    %v149 = vpop.f32.mrf.mxu0
    %v150 = vadd.f32 %v109, %v149
    %151 = vdwg.mxu0
    %v152 = vmax.f32 %v130, 0.0
    %v153 = vmax.f32 %v150, 0.0
    %v154 = vld [vmem:[#allocation4] sm:$0xff]
    %v155 = vld [vmem:[#allocation4 + $0x8] sm:$0xff]
    %v156 = vld [vmem:[#allocation4 + $0x10] sm:$0xff]
    %v157 = vld [vmem:[#allocation4 + $0x18] sm:$0xff]
    %v158 = vld [vmem:[#allocation4 + $0x20] sm:$0xff]
    %v159 = vld [vmem:[#allocation4 + $0x28] sm:$0xff]
    %v160 = vld [vmem:[#allocation4 + $0x30] sm:$0xff]
    %v161 = vld [vmem:[#allocation4 + $0x38] sm:$0xff]
    %v162 = vld [vmem:[#allocation4 + $0x40] sm:$0xff]
    %v163 = vld [vmem:[#allocation4 + $0x48] sm:$0xff]
    %v164 = vld [vmem:[#allocation4 + $0x50] sm:$0xff]
    %v165 = vld [vmem:[#allocation4 + $0x58] sm:$0xff]
    %v166 = vld [vmem:[#allocation4 + $0x60] sm:$0xff]
    %v167 = vld [vmem:[#allocation4 + $0x68] sm:$0xff]
    %v168 = vld [vmem:[#allocation4 + $0x70] sm:$0xff]
    %v169 = vld [vmem:[#allocation4 + $0x78] sm:$0xff]
    %v170 = vld [vmem:[#allocation4 + $0x80] sm:$0xff]
    %v171 = vld [vmem:[#allocation4 + $0x88] sm:$0xff]
    %v172 = vld [vmem:[#allocation4 + $0x90] sm:$0xff]
    %v173 = vld [vmem:[#allocation4 + $0x98] sm:$0xff]
    %v174 = vld [vmem:[#allocation4 + $0xa0] sm:$0xff]
    %v175 = vld [vmem:[#allocation4 + $0xa8] sm:$0xff]
    %v176 = vld [vmem:[#allocation4 + $0xb0] sm:$0xff]
    %v177 = vld [vmem:[#allocation4 + $0xb8] sm:$0xff]
    %v178 = vld [vmem:[#allocation4 + $0xc0] sm:$0xff]
    %v179 = vld [vmem:[#allocation4 + $0xc8] sm:$0xff]
    %v180 = vld [vmem:[#allocation4 + $0xd0] sm:$0xff]
    %v181 = vld [vmem:[#allocation4 + $0xd8] sm:$0xff]
    %v182 = vld [vmem:[#allocation4 + $0xe0] sm:$0xff]
    %v183 = vld [vmem:[#allocation4 + $0xe8] sm:$0xff]
    %v184 = vld [vmem:[#allocation4 + $0xf0] sm:$0xff]
    %v185 = vld [vmem:[#allocation4 + $0xf8] sm:$0xff]
    %v186 = vld [vmem:[#allocation4 + $0x100] sm:$0xff]
    %v187 = vld [vmem:[#allocation4 + $0x108] sm:$0xff]
    %v188 = vld [vmem:[#allocation4 + $0x110] sm:$0xff]
    %v189 = vld [vmem:[#allocation4 + $0x118] sm:$0xff]
    %v190 = vld [vmem:[#allocation4 + $0x120] sm:$0xff]
    %v191 = vld [vmem:[#allocation4 + $0x128] sm:$0xff]
    %v192 = vld [vmem:[#allocation4 + $0x130] sm:$0xff]
    %v193 = vld [vmem:[#allocation4 + $0x138] sm:$0xff]
    %v194 = vld [vmem:[#allocation4 + $0x140] sm:$0xff]
    %v195 = vld [vmem:[#allocation4 + $0x148] sm:$0xff]
    %v196 = vld [vmem:[#allocation4 + $0x150] sm:$0xff]
    %v197 = vld [vmem:[#allocation4 + $0x158] sm:$0xff]
    %v198 = vld [vmem:[#allocation4 + $0x160] sm:$0xff]
    %v199 = vld [vmem:[#allocation4 + $0x168] sm:$0xff]
    %v200 = vld [vmem:[#allocation4 + $0x170] sm:$0xff]
    %v201 = vld [vmem:[#allocation4 + $0x178] sm:$0xff]
    %v202 = vld [vmem:[#allocation4 + $0x180] sm:$0xff]
    %v203 = vld [vmem:[#allocation4 + $0x188] sm:$0xff]
    %v204 = vld [vmem:[#allocation4 + $0x190] sm:$0xff]
    %v205 = vld [vmem:[#allocation4 + $0x198] sm:$0xff]
    %v206 = vld [vmem:[#allocation4 + $0x1a0] sm:$0xff]
    %v207 = vld [vmem:[#allocation4 + $0x1a8] sm:$0xff]
    %v208 = vld [vmem:[#allocation4 + $0x1b0] sm:$0xff]
    %v209 = vld [vmem:[#allocation4 + $0x1b8] sm:$0xff]
    %v210 = vld [vmem:[#allocation4 + $0x1c0] sm:$0xff]
    %v211 = vld [vmem:[#allocation4 + $0x1c8] sm:$0xff]
    %v212 = vld [vmem:[#allocation4 + $0x1d0] sm:$0xff]
    %v213 = vld [vmem:[#allocation4 + $0x1d8] sm:$0xff]
    %v214 = vld [vmem:[#allocation4 + $0x1e0] sm:$0xff]
    %v215 = vld [vmem:[#allocation4 + $0x1e8] sm:$0xff]
    %v216 = vld [vmem:[#allocation4 + $0x1f0] sm:$0xff]
    %v217 = vld [vmem:[#allocation4 + $0x1f8] sm:$0xff]
    %v218 = vld [vmem:[%s4] sm:$0x3]
    %v220 = vperm.slane %v218, 0
    %v221 = vperm.slane %v218, 1
    %224 = vmatpush.msra.mxu0 %v184
    %225 = vmatpush.msra.mxu0 %v182
    %226 = vmatpush.msra.mxu0 %v180
    %227 = vmatpush.msra.mxu0 %v178
    %228 = vmatpush.msra.mxu0 %v176
    %229 = vmatpush.msra.mxu0 %v174
    %230 = vmatpush.msra.mxu0 %v172
    %231 = vmatpush.msra.mxu0 %v170
    %232 = vmatpush.msra.mxu0 %v168
    %233 = vmatpush.msra.mxu0 %v166
    %234 = vmatpush.msra.mxu0 %v164
    %235 = vmatpush.msra.mxu0 %v162
    %236 = vmatpush.msra.mxu0 %v160
    %237 = vmatpush.msra.mxu0 %v158
    %238 = vmatpush.msra.mxu0 %v156
    %239 = vmatpush.msra.mxu0 %v154
    %240 = vmatmul.f32.gmra.mxu0 %v152
    %v241 = vpop.f32.mrf.mxu0
    %v242 = vadd.f32 %v220, %v241
    %243 = vdwg.mxu0
    %244 = vmatpush.msra.mxu0 %v216
    %245 = vmatpush.msra.mxu0 %v214
    %246 = vmatpush.msra.mxu0 %v212
    %247 = vmatpush.msra.mxu0 %v210
    %248 = vmatpush.msra.mxu0 %v208
    %249 = vmatpush.msra.mxu0 %v206
    %250 = vmatpush.msra.mxu0 %v204
    %251 = vmatpush.msra.mxu0 %v202
    %252 = vmatpush.msra.mxu0 %v200
    %253 = vmatpush.msra.mxu0 %v198
    %254 = vmatpush.msra.mxu0 %v196
    %255 = vmatpush.msra.mxu0 %v194
    %256 = vmatpush.msra.mxu0 %v192
    %257 = vmatpush.msra.mxu0 %v190
    %258 = vmatpush.msra.mxu0 %v188
    %259 = vmatpush.msra.mxu0 %v186
    %260 = vmatmul.f32.gmra.mxu0 %v153
    %v261 = vpop.f32.mrf.mxu0
    %v262 = vadd.f32 %v242, %v261
    %263 = vdwg.mxu0
    %264 = vmatpush.msra.mxu0 %v185
    %265 = vmatpush.msra.mxu0 %v183
    %266 = vmatpush.msra.mxu0 %v181
    %267 = vmatpush.msra.mxu0 %v179
    %268 = vmatpush.msra.mxu0 %v177
    %269 = vmatpush.msra.mxu0 %v175
    %270 = vmatpush.msra.mxu0 %v173
    %271 = vmatpush.msra.mxu0 %v171
    %272 = vmatpush.msra.mxu0 %v169
    %273 = vmatpush.msra.mxu0 %v167
    %274 = vmatpush.msra.mxu0 %v165
    %275 = vmatpush.msra.mxu0 %v163
    %276 = vmatpush.msra.mxu0 %v161
    %277 = vmatpush.msra.mxu0 %v159
    %278 = vmatpush.msra.mxu0 %v157
    %279 = vmatpush.msra.mxu0 %v155
    %280 = vmatmul.f32.gmra.mxu0 %v152
    %v281 = vpop.f32.mrf.mxu0
    %v282 = vadd.f32 %v221, %v281
    %283 = vdwg.mxu0
    %284 = vmatpush.msra.mxu0 %v217
    %285 = vmatpush.msra.mxu0 %v215
    %286 = vmatpush.msra.mxu0 %v213
    %287 = vmatpush.msra.mxu0 %v211
    %288 = vmatpush.msra.mxu0 %v209
    %289 = vmatpush.msra.mxu0 %v207
    %290 = vmatpush.msra.mxu0 %v205
    %291 = vmatpush.msra.mxu0 %v203
    %292 = vmatpush.msra.mxu0 %v201
    %293 = vmatpush.msra.mxu0 %v199
    %294 = vmatpush.msra.mxu0 %v197
    %295 = vmatpush.msra.mxu0 %v195
    %296 = vmatpush.msra.mxu0 %v193
    %297 = vmatpush.msra.mxu0 %v191
    %298 = vmatpush.msra.mxu0 %v189
    %299 = vmatpush.msra.mxu0 %v187
    %300 = vmatmul.f32.gmra.mxu0 %v153
    %v301 = vpop.f32.mrf.mxu0
    %v302 = vadd.f32 %v282, %v301
    %303 = vdwg.mxu0
    %v304 = vmax.f32 %v262, 0.0
    %v305 = vmax.f32 %v302, 0.0
    %v306 = vld [vmem:[#allocation6] sm:$0xff]
    %v307 = vld [vmem:[#allocation6 + $0x8] sm:$0xff]
    %v308 = vld [vmem:[#allocation6 + $0x10] sm:$0xff]
    %v309 = vld [vmem:[#allocation6 + $0x18] sm:$0xff]
    %v310 = vld [vmem:[#allocation6 + $0x20] sm:$0xff]
    %v311 = vld [vmem:[#allocation6 + $0x28] sm:$0xff]
    %v312 = vld [vmem:[#allocation6 + $0x30] sm:$0xff]
    %v313 = vld [vmem:[#allocation6 + $0x38] sm:$0xff]
    %v314 = vld [vmem:[#allocation6 + $0x40] sm:$0xff]
    %v315 = vld [vmem:[#allocation6 + $0x48] sm:$0xff]
    %v316 = vld [vmem:[#allocation6 + $0x50] sm:$0xff]
    %v317 = vld [vmem:[#allocation6 + $0x58] sm:$0xff]
    %v318 = vld [vmem:[#allocation6 + $0x60] sm:$0xff]
    %v319 = vld [vmem:[#allocation6 + $0x68] sm:$0xff]
    %v320 = vld [vmem:[#allocation6 + $0x70] sm:$0xff]
    %v321 = vld [vmem:[#allocation6 + $0x78] sm:$0xff]
    %v322 = vld [vmem:[#allocation6 + $0x80] sm:$0xff]
    %v323 = vld [vmem:[#allocation6 + $0x88] sm:$0xff]
    %v324 = vld [vmem:[#allocation6 + $0x90] sm:$0xff]
    %v325 = vld [vmem:[#allocation6 + $0x98] sm:$0xff]
    %v326 = vld [vmem:[#allocation6 + $0xa0] sm:$0xff]
    %v327 = vld [vmem:[#allocation6 + $0xa8] sm:$0xff]
    %v328 = vld [vmem:[#allocation6 + $0xb0] sm:$0xff]
    %v329 = vld [vmem:[#allocation6 + $0xb8] sm:$0xff]
    %v330 = vld [vmem:[#allocation6 + $0xc0] sm:$0xff]
    %v331 = vld [vmem:[#allocation6 + $0xc8] sm:$0xff]
    %v332 = vld [vmem:[#allocation6 + $0xd0] sm:$0xff]
    %v333 = vld [vmem:[#allocation6 + $0xd8] sm:$0xff]
    %v334 = vld [vmem:[#allocation6 + $0xe0] sm:$0xff]
    %v335 = vld [vmem:[#allocation6 + $0xe8] sm:$0xff]
    %v336 = vld [vmem:[#allocation6 + $0xf0] sm:$0xff]
    %v337 = vld [vmem:[#allocation6 + $0xf8] sm:$0xff]
    %v338 = vld [vmem:[%s6] sm:$0x1]
    %v340 = vperm.slane %v338, 0
    %342 = vmatpush.msra.mxu0 %v321
    %343 = vmatpush.msra.mxu0 %v320
    %344 = vmatpush.msra.mxu0 %v319
    %345 = vmatpush.msra.mxu0 %v318
    %346 = vmatpush.msra.mxu0 %v317
    %347 = vmatpush.msra.mxu0 %v316
    %348 = vmatpush.msra.mxu0 %v315
    %349 = vmatpush.msra.mxu0 %v314
    %350 = vmatpush.msra.mxu0 %v313
    %351 = vmatpush.msra.mxu0 %v312
    %352 = vmatpush.msra.mxu0 %v311
    %353 = vmatpush.msra.mxu0 %v310
    %354 = vmatpush.msra.mxu0 %v309
    %355 = vmatpush.msra.mxu0 %v308
    %356 = vmatpush.msra.mxu0 %v307
    %357 = vmatpush.msra.mxu0 %v306
    %358 = vmatmul.f32.gmra.mxu0 %v304
    %v359 = vpop.f32.mrf.mxu0
    %v360 = vadd.f32 %v340, %v359
    %361 = vdwg.mxu0
    %362 = vmatpush.msra.mxu0 %v337
    %363 = vmatpush.msra.mxu0 %v336
    %364 = vmatpush.msra.mxu0 %v335
    %365 = vmatpush.msra.mxu0 %v334
    %366 = vmatpush.msra.mxu0 %v333
    %367 = vmatpush.msra.mxu0 %v332
    %368 = vmatpush.msra.mxu0 %v331
    %369 = vmatpush.msra.mxu0 %v330
    %370 = vmatpush.msra.mxu0 %v329
    %371 = vmatpush.msra.mxu0 %v328
    %372 = vmatpush.msra.mxu0 %v327
    %373 = vmatpush.msra.mxu0 %v326
    %374 = vmatpush.msra.mxu0 %v325
    %375 = vmatpush.msra.mxu0 %v324
    %376 = vmatpush.msra.mxu0 %v323
    %377 = vmatpush.msra.mxu0 %v322
    %378 = vmatmul.f32.gmra.mxu0 %v305
    %v379 = vpop.f32.mrf.mxu0
    %v380 = vadd.f32 %v360, %v379
    %381 = vdwg.mxu0
    %382 = vmax.xlane.f32.xlu0 %v380
    %v383 = vpop.xlane.xlu0 %382
    %v384 = vsub.f32 %v380, %v383
    %v385 = vmul.f32 %v384, 1.442695
    %v386 = vpow.pop %v385
    %387 = vadd.xlane.f32.xlu0 %v386
    %v388 = vpop.xlane.xlu0 %387
    %v389 = vrcp.pop %v388
    %v390 = vmul.f32 %v386, %v389
    %391 = vst [vmem:[%s7] sm:$0xff] %v390
    // Predicated region
    $region42: #{actor_forward.1} parent=1 // pred_check
      _
    $region43: #{actor_forward.1} parent=1 // pred_check_branch
      %393 = sbr.rel (0) target = $region45
    $region44: #{actor_forward.1} parent=1 // pred_region
      _
    $region45: #{actor_forward.1} parent=1 // pred_fallthru
      _
    // Predicated region
    $region46: #{actor_forward.1} parent=1 // pred_check
      _
    $region47: #{actor_forward.1} parent=1 // pred_check_branch
      %395 = sbr.rel (0) target = $region49
    $region48: #{actor_forward.1} parent=1 // pred_region
      _
    $region49: #{actor_forward.1} parent=1 // pred_fallthru
      _
    %396 = vsyncpa [#allocation3], 1
    %397 = vsyncpa [#allocation5], 1

</llo_original>
